<compile_context>
chip_gen: v5e
topology: v5e:2x2
jax: 0.10.0
libtpu: 0.0.40
codegen_flags: <defaults>
</compile_context>

<pallas_src>
import functools

import numpy as np
import jax
import jax.numpy as jnp
from jax.experimental import pallas as pl
from jax.experimental.pallas import tpu as pltpu


def _bilinear_weight_matrix(in_size: int, scale: float) -> np.ndarray:
    """1-D bilinear interpolation matrix W (out,in), PyTorch align_corners=False."""
    out_size = int(np.floor(in_size * scale))
    ratio = 1.0 / float(scale)  # PyTorch uses 1/scale when scale_factor is provided
    o = np.arange(out_size)
    real = (o + 0.5) * ratio - 0.5
    real = np.maximum(real, 0.0)  # PyTorch clamps negative source coords to 0
    i0 = np.minimum(np.floor(real).astype(np.int64), in_size - 1)
    i1 = np.minimum(i0 + 1, in_size - 1)
    lam = (real - i0).astype(np.float32)
    w = np.zeros((out_size, in_size), dtype=np.float32)
    w[o, i0] += (1.0 - lam)
    w[o, i1] += lam
    return w


def _pick_channel_tile(cs, hi, wi, ho, wo, itemsize, budget=2 << 20):
    """Largest divisor of cs whose per-tile working set is ~<= budget bytes."""
    per_ch = hi * wi * itemsize + 4 * (hi * wo + wo * ho + ho * wo)
    cts = max(1, min(cs, budget // max(per_ch, 1)))
    while cs % cts:
        cts -= 1
    return cts


def _crfb_kernel(dst_ref, src_ref, wwt_ref, wht_ref, out_ref, *, c_dst, cts, fused):
    # dst_ref : (1, c_dst, Ho, Wo)        destination pass-through
    # src_ref : (1, cts,   Hi, Wi)        one channel tile of the source
    # wwt_ref : (Wi, Wo)                  column-interp matrix, pre-transposed
    # wht_ref : (Hi, Ho)                  row-interp matrix, pre-transposed
    # out_ref : (1, c_dst + c_src, Ho, Wo)  resident across the channel-tile axis
    ct = pl.program_id(1)
    out_c0 = c_dst + ct * cts

    # Destination channels are written once per batch (output block is resident
    # across the channel-tile axis, so no redundant HBM traffic).
    @pl.when(ct == 0)
    def _copy_destination():
        out_ref[0, :c_dst] = dst_ref[0].astype(out_ref.dtype)

    wwt = wwt_ref[...]                      # (Wi, Wo)
    wht = wht_ref[...]                      # (Hi, Ho)
    hi, ho = wht.shape
    wi, wo = wwt.shape
    src_is_bf16 = src_ref.dtype == jnp.bfloat16

    if fused:
        # Two large MXU contractions per channel tile (channels folded into M).
        s = src_ref[0]                                              # (cts, Hi, Wi)
        y = jnp.dot(s.reshape(cts * hi, wi), wwt,
                    preferred_element_type=jnp.float32)             # (cts*Hi, Wo)
        # (cts, Hi, Wo) -> (cts, Wo, Hi): batched last-two-dim transpose (XLU).
        y = jnp.transpose(y.reshape(cts, hi, wo), (0, 2, 1)).reshape(cts * wo, hi)
        if src_is_bf16:
            y = y.astype(jnp.bfloat16)      # keep MXU at bf16 rate, f32 accum below
        z = jnp.dot(y, wht, preferred_element_type=jnp.float32)     # (cts*Wo, Ho)
        z = jnp.transpose(z.reshape(cts, wo, ho), (0, 2, 1))        # (cts, Ho, Wo)
        out_ref[0, pl.ds(out_c0, cts)] = z.astype(out_ref.dtype)
    else:
        # Fallback for non-sublane-aligned shapes: per-channel, but with bounded
        # live ranges (fori_loop instead of static Python unroll).
        wh = wht.T                                                  # (Ho, Hi)

        def body(c, carry):
            x = src_ref[0, c]                                       # (Hi, Wi)
            y = jnp.dot(x, wwt, preferred_element_type=jnp.float32)  # (Hi, Wo)
            if src_is_bf16:
                y = y.astype(jnp.bfloat16)
            z = jnp.dot(wh, y, preferred_element_type=jnp.float32)   # (Ho, Wo)
            out_ref[0, out_c0 + c] = z.astype(out_ref.dtype)
            return carry

        jax.lax.fori_loop(0, cts, body, 0)


def cross_residual_fusion_block(source, destination, scale_factor=2.0,
                                mode_interpolation="bilinear",
                                mode_merging="concatenate"):
    """CrossResidualFusionBlock.forward(source, destination)."""
    assert mode_interpolation == "bilinear", "only bilinear implemented"
    assert mode_merging == "concatenate", "only concatenate implemented"
    # TODO(synk): 'add'/'multiply' merging and nearest/bicubic/trilinear interpolation
    # modes of the original module are not implemented here.

    B, Cs, Hi, Wi = source.shape
    Bd, Cd, Ho, Wo = destination.shape
    assert B == Bd, "batch mismatch"

    if isinstance(scale_factor, (tuple, list)):
        sh, sw = float(scale_factor[0]), float(scale_factor[1])
    else:
        sh = sw = float(scale_factor)

    wh = _bilinear_weight_matrix(Hi, sh)        # (Ho, Hi)
    ww = _bilinear_weight_matrix(Wi, sw)        # (Wo, Wi)
    assert wh.shape[0] == Ho and ww.shape[0] == Wo, \
        "destination spatial dims must equal interpolated source dims for concat"

    # bf16 sources go straight to the MXU with bf16 weights (f32 accumulation).
    w_dtype = jnp.bfloat16 if source.dtype == jnp.bfloat16 else jnp.float32
    wht = jnp.asarray(wh.T, dtype=w_dtype)      # (Hi, Ho)
    wwt = jnp.asarray(ww.T, dtype=w_dtype)      # (Wi, Wo)

    out_dtype = destination.dtype
    itemsize = lambda dt: jnp.dtype(dt).itemsize

    cts = _pick_channel_tile(Cs, Hi, Wi, Ho, Wo, itemsize(source.dtype))
    n_ct = Cs // cts
    # Fused two-matmul path relies on sublane-friendly reshapes; otherwise use
    # the fori_loop fallback inside the kernel.
    fused = (Hi % 8 == 0) and (Wo % 8 == 0)

    kernel = functools.partial(_crfb_kernel, c_dst=Cd, cts=cts, fused=fused)

    # Explicit VMEM budget (double-buffered blocks + headroom), and a cost
    # estimate so XLA can schedule around the custom call.
    dst_blk = Cd * Ho * Wo * itemsize(destination.dtype)
    src_blk = cts * Hi * Wi * itemsize(source.dtype)
    out_blk = (Cd + Cs) * Ho * Wo * itemsize(out_dtype)
    w_blk = (Hi * Ho + Wi * Wo) * itemsize(w_dtype)
    vmem_limit = int(min(max(2 * (dst_blk + src_blk + out_blk + w_blk) + (8 << 20),
                             32 << 20), 100 << 20))

    flops = 2 * B * Cs * (Hi * Wi * Wo + Hi * Ho * Wo)
    bytes_accessed = (B * (Cs * Hi * Wi * itemsize(source.dtype)
                           + Cd * Ho * Wo * itemsize(destination.dtype)
                           + (Cd + Cs) * Ho * Wo * itemsize(out_dtype))
                      + (Hi * Ho + Wi * Wo) * itemsize(w_dtype))

    out_shape = jax.ShapeDtypeStruct((B, Cd + Cs, Ho, Wo), out_dtype)
    return pl.pallas_call(
        kernel,
        out_shape=out_shape,
        grid_spec=pltpu.PrefetchScalarGridSpec(
            num_scalar_prefetch=0,
            grid=(B, n_ct),
            in_specs=[
                # destination: constant in ct -> fetched once per batch
                pl.BlockSpec((1, Cd, Ho, Wo), lambda b, ct: (b, 0, 0, 0)),
                # source: tiled over channels
                pl.BlockSpec((1, cts, Hi, Wi), lambda b, ct: (b, ct, 0, 0)),
                # interpolation weights: constant index_map -> resident
                pl.BlockSpec((Wi, Wo), lambda b, ct: (0, 0)),
                pl.BlockSpec((Hi, Ho), lambda b, ct: (0, 0)),
            ],
            # output block resident across the channel-tile axis (accumulator style)
            out_specs=pl.BlockSpec((1, Cd + Cs, Ho, Wo), lambda b, ct: (b, 0, 0, 0)),
        ),
        compiler_params=pltpu.CompilerParams(
            dimension_semantics=("parallel", "arbitrary"),
            vmem_limit_bytes=vmem_limit),
        cost_estimate=pl.CostEstimate(flops=flops, transcendentals=0,
                                      bytes_accessed=bytes_accessed),
    )(destination, source, wwt, wht)


def _reference(source, destination, scale_factor):
    # Pure-JAX reference using the same weight matrices (checks kernel plumbing).
    B, Cs, Hi, Wi = source.shape
    wh = jnp.asarray(_bilinear_weight_matrix(Hi, scale_factor))
    ww = jnp.asarray(_bilinear_weight_matrix(Wi, scale_factor))
    interp = jnp.einsum("oh,bchw,pw->bcop", wh, source.astype(jnp.float32), ww,
                        precision=jax.lax.Precision.HIGHEST)
    return jnp.concatenate([destination, interp.astype(destination.dtype)], axis=1)


if __name__ == "__main__":
    key = jax.random.PRNGKey(0)
    k1, k2 = jax.random.split(key)

    scale = 2.0
    B, C_src, H, W = 2, 4, 8, 8
    C_dst = 4
    Ho, Wo = int(H * scale), int(W * scale)

    source = jax.random.normal(k1, (B, C_src, H, W), dtype=jnp.float32)
    destination = jax.random.normal(k2, (B, C_dst, Ho, Wo), dtype=jnp.float32)

    out = cross_residual_fusion_block(source, destination, scale_factor=scale)
    out = jax.block_until_ready(out)

    ref = jax.block_until_ready(_reference(source, destination, scale))
    assert out.shape == (B, C_dst + C_src, Ho, Wo)
    np.testing.assert_allclose(np.asarray(out), np.asarray(ref), rtol=1e-4, atol=1e-4)

    print("KERNEL_OK")
</pallas_src>

<mosaic_0001>
module attributes {stable_mosaic.version = 11 : i64} {
  func.func @_crfb_kernel(%arg0: i32, %arg1: i32, %arg2: memref<1x4x16x16xf32, #tpu.memory_space<vmem>>, %arg3: memref<1x4x8x8xf32, #tpu.memory_space<vmem>>, %arg4: memref<8x16xf32, #tpu.memory_space<vmem>>, %arg5: memref<8x16xf32, #tpu.memory_space<vmem>>, %arg6: memref<1x8x16x16xf32, #tpu.memory_space<vmem>>) attributes {dimension_semantics = [#tpu.dimension_semantics<parallel>, #tpu.dimension_semantics<arbitrary>], iteration_bounds = array<i64: 2, 1>, scalar_prefetch = 0 : i64, scratch_operands = 0 : i64, tpu.core_type = #tpu.core_type<tc>, window_params = [{transform_indices = @transform_0, window_bounds = array<i64: 1, 4, 16, 16>}, {transform_indices = @transform_1, window_bounds = array<i64: 1, 4, 8, 8>}, {pipeline_mode = #tpu.pipeline_mode<synchronous>, transform_indices = @transform_2, window_bounds = array<i64: 8, 16>}, {pipeline_mode = #tpu.pipeline_mode<synchronous>, transform_indices = @transform_3, window_bounds = array<i64: 8, 16>}, {transform_indices = @transform_4, window_bounds = array<i64: 1, 8, 16, 16>}]} {
    %c4_i32 = arith.constant 4 : i32
    %0 = arith.muli %arg1, %c4_i32 : i32
    %c4_i32_0 = arith.constant 4 : i32
    %1 = arith.addi %c4_i32_0, %0 : i32
    %c0_i32 = arith.constant 0 : i32
    %2 = arith.cmpi eq, %arg1, %c0_i32 : i32
    %3 = arith.extui %2 : i1 to i32
    %c0_i32_1 = arith.constant 0 : i32
    %4 = arith.cmpi ne, %3, %c0_i32_1 : i32
    scf.if %4 {
      %c0_13 = arith.constant 0 : index
      %c0_14 = arith.constant 0 : index
      %c0_15 = arith.constant 0 : index
      %c0_16 = arith.constant 0 : index
      %21 = vector.load %arg2[%c0_13, %c0_14, %c0_15, %c0_16] : memref<1x4x16x16xf32, #tpu.memory_space<vmem>>, vector<1x4x16x16xf32>
      %22 = vector.shape_cast %21 : vector<1x4x16x16xf32> to vector<4x16x16xf32>
      %c0_17 = arith.constant 0 : index
      %c0_18 = arith.constant 0 : index
      %c0_19 = arith.constant 0 : index
      %c0_20 = arith.constant 0 : index
      %23 = vector.load %arg6[%c0_17, %c0_18, %c0_19, %c0_20] : memref<1x8x16x16xf32, #tpu.memory_space<vmem>>, vector<1x4x16x16xf32>
      %24 = vector.shape_cast %23 : vector<1x4x16x16xf32> to vector<4x16x16xf32>
      %25 = vector.shape_cast %22 : vector<4x16x16xf32> to vector<1x4x16x16xf32>
      tpu.vector_store %arg6[%c0_17, %c0_18, %c0_19, %c0_20], %25 {strides = array<i32>} : memref<1x8x16x16xf32, #tpu.memory_space<vmem>>, vector<1x4x16x16xf32>,
    } else {
    }
    %c0 = arith.constant 0 : index
    %c0_2 = arith.constant 0 : index
    %5 = vector.load %arg4[%c0, %c0_2] : memref<8x16xf32, #tpu.memory_space<vmem>>, vector<8x16xf32>
    %c0_3 = arith.constant 0 : index
    %c0_4 = arith.constant 0 : index
    %6 = vector.load %arg5[%c0_3, %c0_4] : memref<8x16xf32, #tpu.memory_space<vmem>>, vector<8x16xf32>
    %c0_5 = arith.constant 0 : index
    %c0_6 = arith.constant 0 : index
    %c0_7 = arith.constant 0 : index
    %c0_8 = arith.constant 0 : index
    %7 = vector.load %arg3[%c0_5, %c0_6, %c0_7, %c0_8] : memref<1x4x8x8xf32, #tpu.memory_space<vmem>>, vector<1x4x8x8xf32>
    %8 = vector.shape_cast %7 : vector<1x4x8x8xf32> to vector<4x8x8xf32>
    %9 = vector.shape_cast %8 : vector<4x8x8xf32> to vector<32x8xf32>
    %cst = arith.constant dense<0.000000e+00> : vector<32x16xf32>
    %10 = tpu.matmul %9, %5, %cst {dimension_numbers = #tpu.dot_dimension_numbers<[1], [0], [0], [1], [0, 0, 1, 1], [], []>} : vector<32x8xf32>, vector<8x16xf32>, vector<32x16xf32> -> vector<32x16xf32>
    %11 = vector.shape_cast %10 : vector<32x16xf32> to vector<4x8x16xf32>
    %12 = tpu.transpose %11, [0, 2, 1] : vector<4x8x16xf32> -> vector<4x16x8xf32>
    %13 = vector.shape_cast %12 : vector<4x16x8xf32> to vector<64x8xf32>
    %cst_9 = arith.constant dense<0.000000e+00> : vector<64x16xf32>
    %14 = tpu.matmul %13, %6, %cst_9 {dimension_numbers = #tpu.dot_dimension_numbers<[1], [0], [0], [1], [0, 0, 1, 1], [], []>} : vector<64x8xf32>, vector<8x16xf32>, vector<64x16xf32> -> vector<64x16xf32>
    %15 = vector.shape_cast %14 : vector<64x16xf32> to vector<4x16x16xf32>
    %16 = tpu.transpose %15, [0, 2, 1] : vector<4x16x16xf32> -> vector<4x16x16xf32>
    %c0_10 = arith.constant 0 : index
    %17 = arith.index_cast %1 : i32 to index
    %c0_11 = arith.constant 0 : index
    %c0_12 = arith.constant 0 : index
    %18 = vector.load %arg6[%c0_10, %17, %c0_11, %c0_12] : memref<1x8x16x16xf32, #tpu.memory_space<vmem>>, vector<1x4x16x16xf32>
    %19 = vector.shape_cast %18 : vector<1x4x16x16xf32> to vector<4x16x16xf32>
    %20 = vector.shape_cast %16 : vector<4x16x16xf32> to vector<1x4x16x16xf32>
    tpu.vector_store %arg6[%c0_10, %17, %c0_11, %c0_12], %20 {strides = array<i32>} : memref<1x8x16x16xf32, #tpu.memory_space<vmem>>, vector<1x4x16x16xf32>,
    return
  }
  func.func @transform_0(%arg0: i32, %arg1: i32) -> (i32, i32, i32, i32) {
    %c0_i32 = arith.constant 0 : i32
    %c0_i32_0 = arith.constant 0 : i32
    %c0_i32_1 = arith.constant 0 : i32
    %c0_i32_2 = arith.constant 0 : i32
    return %arg0, %c0_i32, %c0_i32_0, %c0_i32_1 : i32, i32, i32, i32
  }
  func.func @transform_1(%arg0: i32, %arg1: i32) -> (i32, i32, i32, i32) {
    %c0_i32 = arith.constant 0 : i32
    %c0_i32_0 = arith.constant 0 : i32
    %c0_i32_1 = arith.constant 0 : i32
    return %arg0, %arg1, %c0_i32, %c0_i32_0 : i32, i32, i32, i32
  }
  func.func @transform_2(%arg0: i32, %arg1: i32) -> (i32, i32) {
    %c0_i32 = arith.constant 0 : i32
    %c0_i32_0 = arith.constant 0 : i32
    %c0_i32_1 = arith.constant 0 : i32
    return %c0_i32, %c0_i32_0 : i32, i32
  }
  func.func @transform_3(%arg0: i32, %arg1: i32) -> (i32, i32) {
    %c0_i32 = arith.constant 0 : i32
    %c0_i32_0 = arith.constant 0 : i32
    %c0_i32_1 = arith.constant 0 : i32
    return %c0_i32, %c0_i32_0 : i32, i32
  }
  func.func @transform_4(%arg0: i32, %arg1: i32) -> (i32, i32, i32, i32) {
    %c0_i32 = arith.constant 0 : i32
    %c0_i32_0 = arith.constant 0 : i32
    %c0_i32_1 = arith.constant 0 : i32
    %c0_i32_2 = arith.constant 0 : i32
    return %arg0, %c0_i32, %c0_i32_0, %c0_i32_1 : i32, i32, i32, i32
  }
}

</mosaic_0001>

<llo_original>
// kernel: tpu_custom_call.1
$region0: #{tpu_custom_call.1}
  #allocation0 [shape = 'u32[]', space=smem, size = 0x4, offset = 0x4, fixed_abs, tag = 'smem constant byte address 0x4 - core index']
  #allocation1 [shape = 'u32[72,128]{1,0:T(1,128)}', space=vmem, size = 0x9000, scoped, tag = 'internal scratch']
  %s0 = inlined_call_operand.hbm [shape: f32[2,4,16,16], index: 0, kind: input, shape index: {}]
  %s1 = inlined_call_operand.hbm [shape: f32[2,4,8,8], index: 1, kind: input, shape index: {}]
  %s2 = inlined_call_operand.hbm [shape: f32[8,16], index: 2, kind: input, shape index: {}]
  %s3 = inlined_call_operand.hbm [shape: f32[8,16], index: 3, kind: input, shape index: {}]
  %s4 = inlined_call_operand.hbm [shape: f32[2,8,16,16], index: 4, kind: output, shape index: {}]
  %s5 = sld [smem:[#allocation0]]
  $region69: #{tpu_custom_call.1} parent=0
    _
  %s7 = ssub.s32 1, %s5
  %s8 = scalar_select 0, %s7, %s5
  $region1: #{tpu_custom_call.1} parent=0
    #allocation2 [shape = 'u8[65536]{0}', space=vmem, size = 0x10000, scoped, tag = 'input window, operand 0']
    #allocation3 [shape = 's32[2]{0}', space=sflag, size = 0x8, scoped, tag = 'scoped memory for tpu_custom_call.1']
    #allocation4 [shape = 's32[2]{0}', space=sflag, size = 0x8, scoped, tag = 'scoped memory for tpu_custom_call.1']
    #allocation5 [shape = 'u8[32768]{0}', space=vmem, size = 0x8000, scoped, tag = 'input window, operand 1']
    #allocation6 [shape = 's32[2]{0}', space=sflag, size = 0x8, scoped, tag = 'scoped memory for tpu_custom_call.1']
    #allocation7 [shape = 'u8[4096]{0}', space=vmem, size = 0x1000, scoped, tag = 'input window, operand 2, single buffered']
    #allocation8 [shape = 'u8[4096]{0}', space=vmem, size = 0x1000, scoped, tag = 'input window, operand 3, single buffered']
    #allocation9 [shape = 's32[1]{0}', space=sflag, size = 0x4, scoped, tag = 'scoped memory for tpu_custom_call.1']
    #allocation10 [shape = 'u8[131072]{0}', space=vmem, size = 0x20000, scoped, tag = 'output window, operand 0']
    %9 = vsyncpa [#allocation3], 0
    %s10 = scalar_lea.sflag [#allocation3], 1
    %11 = vsyncpa %s10, 0
    %12 = vsyncpa [#allocation6], 0
    %s13 = scalar_lea.sflag [#allocation6], 1
    %14 = vsyncpa %s13, 0
    %15 = vsyncpa [#allocation9], 0
    %16 = vsyncpa [#allocation4], 0
    %s17 = scalar_lea.sflag [#allocation4], 1
    %18 = vsyncpa %s17, 0
    loop: start=0, step=1, limit=4
    $region2: #{tpu_custom_call.1} parent=1 // loop_pre_header
      _
    $region3: #{tpu_custom_call.1} parent=1 // loop_header
      %s20 = sphi 0, %s24
      %p21 = scmp.ge.s32.totalorder %s20, 4
      %s27 = sphi 0, %s39
      %s28 = sphi 0, %s35
      %s29 = sphi 0, %s27
      %s30 = sphi 0, %s28
      %s31 = sphi 0, %s29
      %s32 = sphi 0, %s30
      %s42 = sphi 0, %s44
      %s45 = sphi 0, %s42
      %s46 = sphi 0, %s45
      %s62 = sphi 0, %s46
      %s70 = sphi 0, %s72
      %s73 = sphi 0, %s70
      %s74 = sphi 0, %s73
      %s90 = sphi 0, %s74
      %s94 = sphi 0, %s94
      %s96 = sphi 0, %s94
      %s97 = sphi 0, %s96
      %s111 = sphi 0, %s97
      %s115 = sphi 0, %s115
      %s117 = sphi 0, %s115
      %s118 = sphi 0, %s117
      %s132 = sphi 0, %s118
      %s138 = sphi 0, %s140
      %s141 = sphi 0, %s138
      %s142 = sphi 0, %s141
      %s158 = sphi 0, %s142
    $region4: #{tpu_custom_call.1} parent=1 // loop_header_branch
      %23 = sbr.rel (%p21) target = $region8
    $region5: #{tpu_custom_call.1} parent=1 // loop_body
      %s25 = ssub.s32 %s20, 1
      %s26 = ssub.s32 %s20, 2
      %s33 = sadd.s32 1, %s28
      %p34 = scmp.ge.s32.totalorder %s33, 1
      %s35 = scalar_select %p34, 0, %s33
      %s36 = sadd.s32 1, %s27
      %s37 = scalar_select %p34, %s36, %s27
      %p38 = scmp.ge.s32.totalorder %s37, 2
      %s39 = scalar_select %p38, 0, %s37
      %s40 = ssub.s32 %s27, %s39
      %p41 = scmp.eq.s32.totalorder %s40, 0
      %s43 = sadd.s32 %s42, 1
      %s44 = scalar_select %p41, %s42, %s43
      %p47 = pneg %p41
      %p48 = scmp.eq.s32.totalorder %s20, 1
      %p49 = por %p47, %p48
      %p50 = scmp.ne.s32.totalorder %s42, %s45
      %p51 = scmp.eq.s32.totalorder %s20, 0
      %p52 = por %p50, %p51
      %p53 = scmp.ne.s32.totalorder %s42, %s45
      %p54 = scmp.eq.s32.totalorder %s25, 1
      %p55 = por %p53, %p54
      %p56 = scmp.ne.s32.totalorder %s45, %s46
      %p57 = scmp.eq.s32.totalorder %s25, 0
      %p58 = por %p56, %p57
      %p59 = scmp.ne.s32.totalorder %s45, %s46
      %p60 = scmp.eq.s32.totalorder %s26, 1
      %p61 = por %p59, %p60
      %p63 = scmp.ne.s32.totalorder %s46, %s62
      %p64 = scmp.eq.s32.totalorder %s26, 0
      %p65 = por %p63, %p64
      %s66 = ssub.s32 %s27, %s39
      %s67 = ssub.s32 %s28, %s35
      %s68 = sor.u32 %s66, %s67
      %p69 = scmp.eq.s32.totalorder %s68, 0
      %s71 = sadd.s32 %s70, 1
      %s72 = scalar_select %p69, %s70, %s71
      %p75 = pneg %p69
      %p76 = scmp.eq.s32.totalorder %s20, 1
      %p77 = por %p75, %p76
      %p78 = scmp.ne.s32.totalorder %s70, %s73
      %p79 = scmp.eq.s32.totalorder %s20, 0
      %p80 = por %p78, %p79
      %p81 = scmp.ne.s32.totalorder %s70, %s73
      %p82 = scmp.eq.s32.totalorder %s25, 1
      %p83 = por %p81, %p82
      %p84 = scmp.ne.s32.totalorder %s73, %s74
      %p85 = scmp.eq.s32.totalorder %s25, 0
      %p86 = por %p84, %p85
      %p87 = scmp.ne.s32.totalorder %s73, %s74
      %p88 = scmp.eq.s32.totalorder %s26, 1
      %p89 = por %p87, %p88
      %p91 = scmp.ne.s32.totalorder %s74, %s90
      %p92 = scmp.eq.s32.totalorder %s26, 0
      %p93 = por %p91, %p92
      %s95 = sadd.s32 %s94, 1
      %p98 = scmp.eq.s32.totalorder %s20, 1
      %p99 = scmp.ne.s32.totalorder %s94, %s96
      %p100 = scmp.eq.s32.totalorder %s20, 0
      %p101 = por %p99, %p100
      %p102 = scmp.ne.s32.totalorder %s94, %s96
      %p103 = scmp.eq.s32.totalorder %s25, 1
      %p104 = por %p102, %p103
      %p105 = scmp.ne.s32.totalorder %s96, %s97
      %p106 = scmp.eq.s32.totalorder %s25, 0
      %p107 = por %p105, %p106
      %p108 = scmp.ne.s32.totalorder %s96, %s97
      %p109 = scmp.eq.s32.totalorder %s26, 1
      %p110 = por %p108, %p109
      %p112 = scmp.ne.s32.totalorder %s97, %s111
      %p113 = scmp.eq.s32.totalorder %s26, 0
      %p114 = por %p112, %p113
      %s116 = sadd.s32 %s115, 1
      %p119 = scmp.eq.s32.totalorder %s20, 1
      %p120 = scmp.ne.s32.totalorder %s115, %s117
      %p121 = scmp.eq.s32.totalorder %s20, 0
      %p122 = por %p120, %p121
      %p123 = scmp.ne.s32.totalorder %s115, %s117
      %p124 = scmp.eq.s32.totalorder %s25, 1
      %p125 = por %p123, %p124
      %p126 = scmp.ne.s32.totalorder %s117, %s118
      %p127 = scmp.eq.s32.totalorder %s25, 0
      %p128 = por %p126, %p127
      %p129 = scmp.ne.s32.totalorder %s117, %s118
      %p130 = scmp.eq.s32.totalorder %s26, 1
      %p131 = por %p129, %p130
      %p133 = scmp.ne.s32.totalorder %s118, %s132
      %p134 = scmp.eq.s32.totalorder %s26, 0
      %p135 = por %p133, %p134
      %s136 = ssub.s32 %s27, %s39
      %p137 = scmp.eq.s32.totalorder %s136, 0
      %s139 = sadd.s32 %s138, 1
      %s140 = scalar_select %p137, %s138, %s139
      %p143 = pneg %p137
      %p144 = scmp.eq.s32.totalorder %s20, 1
      %p145 = por %p143, %p144
      %p146 = scmp.ne.s32.totalorder %s138, %s141
      %p147 = scmp.eq.s32.totalorder %s20, 0
      %p148 = por %p146, %p147
      %p149 = scmp.ne.s32.totalorder %s138, %s141
      %p150 = scmp.eq.s32.totalorder %s25, 1
      %p151 = por %p149, %p150
      %p152 = scmp.ne.s32.totalorder %s141, %s142
      %p153 = scmp.eq.s32.totalorder %s25, 0
      %p154 = por %p152, %p153
      %p155 = scmp.ne.s32.totalorder %s141, %s142
      %p156 = scmp.eq.s32.totalorder %s26, 1
      %p157 = por %p155, %p156
      %p159 = scmp.ne.s32.totalorder %s142, %s158
      %p160 = scmp.eq.s32.totalorder %s26, 0
      %p161 = por %p159, %p160
      %p162 = scmp.le.s32.totalorder 1, %s20
      %p163 = scmp.lt.s32.totalorder %s20, 3
      %p164 = pnand %p162, %p163
      %p165 = pneg %p164
      // Predicated region
      $region9: #{tpu_custom_call.1} parent=5 // pred_check
        _
      $region10: #{tpu_custom_call.1} parent=5 // pred_check_branch
        %167 = sbr.rel (%p164) target = $region12
      $region11: #{tpu_custom_call.1} parent=5 // pred_region
        %s168 = ssub.s32 %s20, 1
        // Predicated region
        $region13: #{tpu_custom_call.1} parent=11 // pred_check
          %p169 = pneg %p107
        $region14: #{tpu_custom_call.1} parent=11 // pred_check_branch
          %171 = sbr.rel (%p169) target = $region16
        $region15: #{tpu_custom_call.1} parent=11 // pred_region
          %173 = vsyncadd [#allocation6], 0
          %s175 = sshll.u32 %s2, 4
          %s176 = int_to_ptr.hbm [resolvable:$true] %s175
          %s177 = sshll.u32 [#allocation7], 4
          %s178 = int_to_ptr.vmem [resolvable:$true] %s177
          %180 = dma.hbm_to_vmem [thread:$0]  %s176, 128, %s178, [#allocation6]
        $region16: #{tpu_custom_call.1} parent=11 // pred_fallthru
          _
        // Predicated region
        $region17: #{tpu_custom_call.1} parent=11 // pred_check
          %p181 = pneg %p128
        $region18: #{tpu_custom_call.1} parent=11 // pred_check_branch
          %183 = sbr.rel (%p181) target = $region20
        $region19: #{tpu_custom_call.1} parent=11 // pred_region
          %185 = vsyncadd [#allocation9], 0
          %s187 = sshll.u32 %s3, 4
          %s188 = int_to_ptr.hbm [resolvable:$true] %s187
          %s189 = sshll.u32 [#allocation8], 4
          %s190 = int_to_ptr.vmem [resolvable:$true] %s189
          %192 = dma.hbm_to_vmem [thread:$0]  %s188, 128, %s190, [#allocation9]
        $region20: #{tpu_custom_call.1} parent=11 // pred_fallthru
          _
      $region12: #{tpu_custom_call.1} parent=5 // pred_fallthru
        _
      %p193 = scmp.lt.s32.totalorder %s20, 2
      // Predicated region
      $region21: #{tpu_custom_call.1} parent=5 // pred_check
        %p194 = pneg %p193
      $region22: #{tpu_custom_call.1} parent=5 // pred_check_branch
        %196 = sbr.rel (%p194) target = $region24
      $region23: #{tpu_custom_call.1} parent=5 // pred_region
        // Predicated region
        $region25: #{tpu_custom_call.1} parent=23 // pred_check
          %p197 = pneg %p52
        $region26: #{tpu_custom_call.1} parent=23 // pred_check_branch
          %199 = sbr.rel (%p197) target = $region28
        $region27: #{tpu_custom_call.1} parent=23 // pred_region
          %s200 = sand.u32 %s42, 1
          %s201 = scalar_lea.sflag [#allocation3], %s200
          %s202 = sand.u32 %s42, 1
          %s203 = smul.addr %s202, 64
          %s204 = scalar_lea.vmem [#allocation2], %s203
          %206 = vsyncadd %s201, 0
          %s207 = smul.addr %s27, 8
          %s208 = smul.addr %s207, 8
          %s209 = scalar_lea.hbm %s0, %s208
          %s210 = sshll.u32 %s209, 4
          %s211 = int_to_ptr.hbm [resolvable:$true] %s210
          %s212 = sshll.u32 %s204, 4
          %s213 = int_to_ptr.vmem [resolvable:$true] %s212
          %218 = dma.hbm_to_vmem [thread:$0]  %s211, 1024, %s213, %s201, 128, 128, 8
        $region28: #{tpu_custom_call.1} parent=23 // pred_fallthru
          _
        // Predicated region
        $region29: #{tpu_custom_call.1} parent=23 // pred_check
          %p219 = pneg %p80
        $region30: #{tpu_custom_call.1} parent=23 // pred_check_branch
          %221 = sbr.rel (%p219) target = $region32
        $region31: #{tpu_custom_call.1} parent=23 // pred_region
          %s222 = sand.u32 %s20, 1
          %s223 = scalar_lea.sflag [#allocation6], %s222
          %s224 = sand.u32 %s70, 1
          %s225 = smul.addr %s224, 32
          %s226 = scalar_lea.vmem [#allocation5], %s225
          %s227 = smul.u32 4, %s28
          %229 = vsyncadd %s223, 0
          %s230 = smul.addr %s27, 4
          %s231 = sadd.s32 %s227, %s230
          %s232 = smul.addr %s231, 8
          %s233 = scalar_lea.hbm %s1, %s232
          %s234 = sshll.u32 %s233, 4
          %s235 = int_to_ptr.hbm [resolvable:$true] %s234
          %s236 = sshll.u32 %s226, 4
          %s237 = int_to_ptr.vmem [resolvable:$true] %s236
          %242 = dma.hbm_to_vmem [thread:$0]  %s235, 512, %s237, %s223, 128, 128, 8
        $region32: #{tpu_custom_call.1} parent=23 // pred_fallthru
          _
      $region24: #{tpu_custom_call.1} parent=5 // pred_fallthru
        _
      %p243 = scmp.le.s32.totalorder 1, %s20
      %p244 = scmp.lt.s32.totalorder %s20, 3
      %p245 = pnand %p243, %p244
      %p246 = pneg %p245
      // Predicated region
      $region33: #{tpu_custom_call.1} parent=5 // pred_check
        _
      $region34: #{tpu_custom_call.1} parent=5 // pred_check_branch
        %248 = sbr.rel (%p245) target = $region36
      $region35: #{tpu_custom_call.1} parent=5 // pred_region
        %s249 = ssub.s32 %s20, 1
        %s250 = sand.u32 %s45, 1
        %s251 = scalar_lea.sflag [#allocation3], %s250
        %s252 = sand.u32 %s45, 1
        %s253 = smul.addr %s252, 64
        %s254 = scalar_lea.vmem [#allocation2], %s253
        // Predicated region
        $region37: #{tpu_custom_call.1} parent=35 // pred_check
          %p255 = pneg %p58
        $region38: #{tpu_custom_call.1} parent=35 // pred_check_branch
          %257 = sbr.rel (%p255) target = $region40
        $region39: #{tpu_custom_call.1} parent=35 // pred_region
          %259 = dma.done %s251, 1024
        $region40: #{tpu_custom_call.1} parent=35 // pred_fallthru
          _
        %s260 = sand.u32 %s25, 1
        %s261 = scalar_lea.sflag [#allocation6], %s260
        %s262 = sand.u32 %s73, 1
        %s263 = smul.addr %s262, 32
        %s264 = scalar_lea.vmem [#allocation5], %s263
        // Predicated region
        $region41: #{tpu_custom_call.1} parent=35 // pred_check
          %p265 = pneg %p86
        $region42: #{tpu_custom_call.1} parent=35 // pred_check_branch
          %267 = sbr.rel (%p265) target = $region44
        $region43: #{tpu_custom_call.1} parent=35 // pred_region
          %269 = dma.done %s261, 512
        $region44: #{tpu_custom_call.1} parent=35 // pred_fallthru
          _
        // Predicated region
        $region45: #{tpu_custom_call.1} parent=35 // pred_check
          %p270 = pneg %p107
        $region46: #{tpu_custom_call.1} parent=35 // pred_check_branch
          %272 = sbr.rel (%p270) target = $region48
        $region47: #{tpu_custom_call.1} parent=35 // pred_region
          %274 = dma.done [#allocation6], 128
        $region48: #{tpu_custom_call.1} parent=35 // pred_fallthru
          _
        // Predicated region
        $region49: #{tpu_custom_call.1} parent=35 // pred_check
          %p275 = pneg %p128
        $region50: #{tpu_custom_call.1} parent=35 // pred_check_branch
          %277 = sbr.rel (%p275) target = $region52
        $region51: #{tpu_custom_call.1} parent=35 // pred_region
          %279 = dma.done [#allocation9], 128
        $region52: #{tpu_custom_call.1} parent=35 // pred_fallthru
          _
        %s280 = sand.u32 %s45, 1
        %s281 = scalar_lea.sflag [#allocation3], %s280
        %s282 = sand.u32 %s45, 1
        %s283 = smul.addr %s282, 64
        %s284 = scalar_lea.vmem [#allocation2], %s283
        %p285 = pneg %p58
        %p286 = pneg %p55
        %s287 = sand.u32 %s25, 1
        %s288 = scalar_lea.sflag [#allocation6], %s287
        %s289 = sand.u32 %s73, 1
        %s290 = smul.addr %s289, 32
        %s291 = scalar_lea.vmem [#allocation5], %s290
        %p292 = pneg %p86
        %p293 = pneg %p83
        %p294 = pneg %p107
        %p295 = pneg %p104
        %p296 = pneg %p128
        %p297 = pneg %p125
        %p298 = pneg %p154
        %p299 = pneg %p151
        %s300 = sand.u32 %s141, 1
        %s301 = scalar_lea.sflag [#allocation4], %s300
        %s302 = sand.u32 %s141, 1
        %s303 = smul.addr %s302, 128
        %s304 = scalar_lea.vmem [#allocation10], %s303
        %s305 = smul.u32 4, %s30
        %s306 = smul.u32 %s30, 4
        %s307 = sadd.s32 %s306, 4
        %p308 = scmp.eq.s32.totalorder %s30, 0
        // Predicated region
        $region53: #{tpu_custom_call.1} parent=35 // pred_check
          %p309 = pneg %p308
        $region54: #{tpu_custom_call.1} parent=35 // pred_check_branch
          %311 = sbr.rel (%p309) target = $region56
        $region55: #{tpu_custom_call.1} parent=35 // pred_region
          %v312 = vld [vmem:[%s254] sm:$0xff]
          %v313 = vld [vmem:[%s254 + $0x8] sm:$0xff]
          %v314 = vld [vmem:[%s254 + $0x10] sm:$0xff]
          %v315 = vld [vmem:[%s254 + $0x18] sm:$0xff]
          %v316 = vld [vmem:[%s254 + $0x20] sm:$0xff]
          %v317 = vld [vmem:[%s254 + $0x28] sm:$0xff]
          %v318 = vld [vmem:[%s254 + $0x30] sm:$0xff]
          %v319 = vld [vmem:[%s254 + $0x38] sm:$0xff]
          %vm320 = vcmask 130048
          %321 = vst.msk [vmem:[%s304] sm:$0xff] %vm320, %v312
          %322 = vst.msk [vmem:[%s304 + $0x8] sm:$0xff] %vm320, %v313
          %323 = vst.msk [vmem:[%s304 + $0x10] sm:$0xff] %vm320, %v314
          %324 = vst.msk [vmem:[%s304 + $0x18] sm:$0xff] %vm320, %v315
          %325 = vst.msk [vmem:[%s304 + $0x20] sm:$0xff] %vm320, %v316
          %326 = vst.msk [vmem:[%s304 + $0x28] sm:$0xff] %vm320, %v317
          %327 = vst.msk [vmem:[%s304 + $0x30] sm:$0xff] %vm320, %v318
          %328 = vst.msk [vmem:[%s304 + $0x38] sm:$0xff] %vm320, %v319
        $region56: #{tpu_custom_call.1} parent=35 // pred_fallthru
          _
        %v329 = vld [vmem:[#allocation7] sm:$0xff]
        %v330 = vld [vmem:[#allocation8] sm:$0xff]
        %v331 = vld [vmem:[%s264] sm:$0xff]
        %v332 = vld [vmem:[%s264 + $0x8] sm:$0xff]
        %v333 = vld [vmem:[%s264 + $0x10] sm:$0xff]
        %v334 = vld [vmem:[%s264 + $0x18] sm:$0xff]
        %vm335 = vcmask 64512
        %v337 = vsel %vm335, %v331, 0
        %v340 = vsel %vm335, %v332, 0
        %v343 = vsel %vm335, %v333, 0
        %v346 = vsel %vm335, %v334, 0
        %348 = vmatpush.msra.mxu0 0.0
        %349 = vmatpush.msra.mxu0 0.0
        %350 = vmatpush.msra.mxu0 0.0
        %351 = vmatpush.msra.mxu0 0.0
        %352 = vmatpush.msra.mxu0 0.0
        %353 = vmatpush.msra.mxu0 0.0
        %354 = vmatpush.msra.mxu0 0.0
        %355 = vmatpush.msra.mxu0 0.0
        %356 = vmatpush.msra.mxu0 0.0
        %357 = vmatpush.msra.mxu0 0.0
        %358 = vmatpush.msra.mxu0 0.0
        %359 = vmatpush.msra.mxu0 0.0
        %360 = vmatpush.msra.mxu0 0.0
        %361 = vmatpush.msra.mxu0 0.0
        %362 = vmatpush.msra.mxu0 0.0
        %363 = vmatpush.msra.mxu0 %v329
        %364 = vmatmul.f32.gmra.mxu0 %v337
        %v365 = vpop.f32.mrf.mxu0
        %v366 = vadd.f32 0.0, %v365
        %367 = vmatmul.f32.gmra.mxu0 %v340
        %v368 = vpop.f32.mrf.mxu0
        %v369 = vadd.f32 0.0, %v368
        %370 = vmatmul.f32.gmra.mxu0 %v343
        %v371 = vpop.f32.mrf.mxu0
        %v372 = vadd.f32 0.0, %v371
        %373 = vmatmul.f32.gmra.mxu0 %v346
        %v374 = vpop.f32.mrf.mxu0
        %v375 = vadd.f32 0.0, %v374
        %376 = vdwg.mxu0
        %377 = vxpose.xlu0.b32.start [1/16] %v366, 128
        %378 = vxpose.xlu0.b32.cont [2/16] 0.0, 128
        %379 = vxpose.xlu0.b32.cont [3/16] 0.0, 128
        %380 = vxpose.xlu0.b32.cont [4/16] 0.0, 128
        %381 = vxpose.xlu0.b32.cont [5/16] 0.0, 128
        %382 = vxpose.xlu0.b32.cont [6/16] 0.0, 128
        %383 = vxpose.xlu0.b32.cont [7/16] 0.0, 128
        %384 = vxpose.xlu0.b32.cont [8/16] 0.0, 128
        %385 = vxpose.xlu0.b32.cont [9/16] 0.0, 128
        %386 = vxpose.xlu0.b32.cont [10/16] 0.0, 128
        %387 = vxpose.xlu0.b32.cont [11/16] 0.0, 128
        %388 = vxpose.xlu0.b32.cont [12/16] 0.0, 128
        %389 = vxpose.xlu0.b32.cont [13/16] 0.0, 128
        %390 = vxpose.xlu0.b32.cont [14/16] 0.0, 128
        %391 = vxpose.xlu0.b32.cont [15/16] 0.0, 128
        %392 = vxpose.xlu0.b32.end [16/16] 0.0, 128
        %v393 = vpop.trf.xlu0
        %v394 = vpop.trf.xlu0
        %v395 = vpop.trf.xlu0
        %v396 = vpop.trf.xlu0
        %v397 = vpop.trf.xlu0
        %v398 = vpop.trf.xlu0
        %v399 = vpop.trf.xlu0
        %v400 = vpop.trf.xlu0
        %v401 = vpop.trf.xlu0
        %v402 = vpop.trf.xlu0
        %v403 = vpop.trf.xlu0
        %v404 = vpop.trf.xlu0
        %v405 = vpop.trf.xlu0
        %v406 = vpop.trf.xlu0
        %v407 = vpop.trf.xlu0
        %v408 = vpop.trf.xlu0
        %409 = vxpose.xlu0.b32.start [1/16] %v369, 128
        %410 = vxpose.xlu0.b32.cont [2/16] 0.0, 128
        %411 = vxpose.xlu0.b32.cont [3/16] 0.0, 128
        %412 = vxpose.xlu0.b32.cont [4/16] 0.0, 128
        %413 = vxpose.xlu0.b32.cont [5/16] 0.0, 128
        %414 = vxpose.xlu0.b32.cont [6/16] 0.0, 128
        %415 = vxpose.xlu0.b32.cont [7/16] 0.0, 128
        %416 = vxpose.xlu0.b32.cont [8/16] 0.0, 128
        %417 = vxpose.xlu0.b32.cont [9/16] 0.0, 128
        %418 = vxpose.xlu0.b32.cont [10/16] 0.0, 128
        %419 = vxpose.xlu0.b32.cont [11/16] 0.0, 128
        %420 = vxpose.xlu0.b32.cont [12/16] 0.0, 128
        %421 = vxpose.xlu0.b32.cont [13/16] 0.0, 128
        %422 = vxpose.xlu0.b32.cont [14/16] 0.0, 128
        %423 = vxpose.xlu0.b32.cont [15/16] 0.0, 128
        %424 = vxpose.xlu0.b32.end [16/16] 0.0, 128
        %v425 = vpop.trf.xlu0
        %v426 = vpop.trf.xlu0
        %v427 = vpop.trf.xlu0
        %v428 = vpop.trf.xlu0
        %v429 = vpop.trf.xlu0
        %v430 = vpop.trf.xlu0
        %v431 = vpop.trf.xlu0
        %v432 = vpop.trf.xlu0
        %v433 = vpop.trf.xlu0
        %v434 = vpop.trf.xlu0
        %v435 = vpop.trf.xlu0
        %v436 = vpop.trf.xlu0
        %v437 = vpop.trf.xlu0
        %v438 = vpop.trf.xlu0
        %v439 = vpop.trf.xlu0
        %v440 = vpop.trf.xlu0
        %441 = vxpose.xlu0.b32.start [1/16] %v372, 128
        %442 = vxpose.xlu0.b32.cont [2/16] 0.0, 128
        %443 = vxpose.xlu0.b32.cont [3/16] 0.0, 128
        %444 = vxpose.xlu0.b32.cont [4/16] 0.0, 128
        %445 = vxpose.xlu0.b32.cont [5/16] 0.0, 128
        %446 = vxpose.xlu0.b32.cont [6/16] 0.0, 128
        %447 = vxpose.xlu0.b32.cont [7/16] 0.0, 128
        %448 = vxpose.xlu0.b32.cont [8/16] 0.0, 128
        %449 = vxpose.xlu0.b32.cont [9/16] 0.0, 128
        %450 = vxpose.xlu0.b32.cont [10/16] 0.0, 128
        %451 = vxpose.xlu0.b32.cont [11/16] 0.0, 128
        %452 = vxpose.xlu0.b32.cont [12/16] 0.0, 128
        %453 = vxpose.xlu0.b32.cont [13/16] 0.0, 128
        %454 = vxpose.xlu0.b32.cont [14/16] 0.0, 128
        %455 = vxpose.xlu0.b32.cont [15/16] 0.0, 128
        %456 = vxpose.xlu0.b32.end [16/16] 0.0, 128
        %v457 = vpop.trf.xlu0
        %v458 = vpop.trf.xlu0
        %v459 = vpop.trf.xlu0
        %v460 = vpop.trf.xlu0
        %v461 = vpop.trf.xlu0
        %v462 = vpop.trf.xlu0
        %v463 = vpop.trf.xlu0
        %v464 = vpop.trf.xlu0
        %v465 = vpop.trf.xlu0
        %v466 = vpop.trf.xlu0
        %v467 = vpop.trf.xlu0
        %v468 = vpop.trf.xlu0
        %v469 = vpop.trf.xlu0
        %v470 = vpop.trf.xlu0
        %v471 = vpop.trf.xlu0
        %v472 = vpop.trf.xlu0
        %473 = vxpose.xlu0.b32.start [1/16] %v375, 128
        %474 = vxpose.xlu0.b32.cont [2/16] 0.0, 128
        %475 = vxpose.xlu0.b32.cont [3/16] 0.0, 128
        %476 = vxpose.xlu0.b32.cont [4/16] 0.0, 128
        %477 = vxpose.xlu0.b32.cont [5/16] 0.0, 128
        %478 = vxpose.xlu0.b32.cont [6/16] 0.0, 128
        %479 = vxpose.xlu0.b32.cont [7/16] 0.0, 128
        %480 = vxpose.xlu0.b32.cont [8/16] 0.0, 128
        %481 = vxpose.xlu0.b32.cont [9/16] 0.0, 128
        %482 = vxpose.xlu0.b32.cont [10/16] 0.0, 128
        %483 = vxpose.xlu0.b32.cont [11/16] 0.0, 128
        %484 = vxpose.xlu0.b32.cont [12/16] 0.0, 128
        %485 = vxpose.xlu0.b32.cont [13/16] 0.0, 128
        %486 = vxpose.xlu0.b32.cont [14/16] 0.0, 128
        %487 = vxpose.xlu0.b32.cont [15/16] 0.0, 128
        %488 = vxpose.xlu0.b32.end [16/16] 0.0, 128
        %v489 = vpop.trf.xlu0
        %v490 = vpop.trf.xlu0
        %v491 = vpop.trf.xlu0
        %v492 = vpop.trf.xlu0
        %v493 = vpop.trf.xlu0
        %v494 = vpop.trf.xlu0
        %v495 = vpop.trf.xlu0
        %v496 = vpop.trf.xlu0
        %v497 = vpop.trf.xlu0
        %v498 = vpop.trf.xlu0
        %v499 = vpop.trf.xlu0
        %v500 = vpop.trf.xlu0
        %v501 = vpop.trf.xlu0
        %v502 = vpop.trf.xlu0
        %v503 = vpop.trf.xlu0
        %v504 = vpop.trf.xlu0
        %v506 = vsel %vm335, %v393, 0
        %v509 = vsel %vm335, %v394, 0
        %v512 = vsel %vm335, %v425, 0
        %v515 = vsel %vm335, %v426, 0
        %v518 = vsel %vm335, %v457, 0
        %v521 = vsel %vm335, %v458, 0
        %v524 = vsel %vm335, %v489, 0
        %v527 = vsel %vm335, %v490, 0
        %529 = vmatpush.msra.mxu0 0.0
        %530 = vmatpush.msra.mxu0 0.0
        %531 = vmatpush.msra.mxu0 0.0
        %532 = vmatpush.msra.mxu0 0.0
        %533 = vmatpush.msra.mxu0 0.0
        %534 = vmatpush.msra.mxu0 0.0
        %535 = vmatpush.msra.mxu0 0.0
        %536 = vmatpush.msra.mxu0 0.0
        %537 = vmatpush.msra.mxu0 0.0
        %538 = vmatpush.msra.mxu0 0.0
        %539 = vmatpush.msra.mxu0 0.0
        %540 = vmatpush.msra.mxu0 0.0
        %541 = vmatpush.msra.mxu0 0.0
        %542 = vmatpush.msra.mxu0 0.0
        %543 = vmatpush.msra.mxu0 0.0
        %544 = vmatpush.msra.mxu0 %v330
        %545 = vmatmul.f32.gmra.mxu0 %v506
        %v546 = vpop.f32.mrf.mxu0
        %v547 = vadd.f32 0.0, %v546
        %548 = vmatmul.f32.gmra.mxu0 %v509
        %v549 = vpop.f32.mrf.mxu0
        %v550 = vadd.f32 0.0, %v549
        %551 = vmatmul.f32.gmra.mxu0 %v512
        %v552 = vpop.f32.mrf.mxu0
        %v553 = vadd.f32 0.0, %v552
        %554 = vmatmul.f32.gmra.mxu0 %v515
        %v555 = vpop.f32.mrf.mxu0
        %v556 = vadd.f32 0.0, %v555
        %557 = vmatmul.f32.gmra.mxu0 %v518
        %v558 = vpop.f32.mrf.mxu0
        %v559 = vadd.f32 0.0, %v558
        %560 = vmatmul.f32.gmra.mxu0 %v521
        %v561 = vpop.f32.mrf.mxu0
        %v562 = vadd.f32 0.0, %v561
        %563 = vmatmul.f32.gmra.mxu0 %v524
        %v564 = vpop.f32.mrf.mxu0
        %v565 = vadd.f32 0.0, %v564
        %566 = vmatmul.f32.gmra.mxu0 %v527
        %v567 = vpop.f32.mrf.mxu0
        %v568 = vadd.f32 0.0, %v567
        %569 = vdwg.mxu0
        %570 = vxpose.xlu0.b32.start [1/16] %v547, 128
        %571 = vxpose.xlu0.b32.cont [2/16] %v550, 128
        %572 = vxpose.xlu0.b32.cont [3/16] 0.0, 128
        %573 = vxpose.xlu0.b32.cont [4/16] 0.0, 128
        %574 = vxpose.xlu0.b32.cont [5/16] 0.0, 128
        %575 = vxpose.xlu0.b32.cont [6/16] 0.0, 128
        %576 = vxpose.xlu0.b32.cont [7/16] 0.0, 128
        %577 = vxpose.xlu0.b32.cont [8/16] 0.0, 128
        %578 = vxpose.xlu0.b32.cont [9/16] 0.0, 128
        %579 = vxpose.xlu0.b32.cont [10/16] 0.0, 128
        %580 = vxpose.xlu0.b32.cont [11/16] 0.0, 128
        %581 = vxpose.xlu0.b32.cont [12/16] 0.0, 128
        %582 = vxpose.xlu0.b32.cont [13/16] 0.0, 128
        %583 = vxpose.xlu0.b32.cont [14/16] 0.0, 128
        %584 = vxpose.xlu0.b32.cont [15/16] 0.0, 128
        %585 = vxpose.xlu0.b32.end [16/16] 0.0, 128
        %v586 = vpop.trf.xlu0
        %v587 = vpop.trf.xlu0
        %v588 = vpop.trf.xlu0
        %v589 = vpop.trf.xlu0
        %v590 = vpop.trf.xlu0
        %v591 = vpop.trf.xlu0
        %v592 = vpop.trf.xlu0
        %v593 = vpop.trf.xlu0
        %v594 = vpop.trf.xlu0
        %v595 = vpop.trf.xlu0
        %v596 = vpop.trf.xlu0
        %v597 = vpop.trf.xlu0
        %v598 = vpop.trf.xlu0
        %v599 = vpop.trf.xlu0
        %v600 = vpop.trf.xlu0
        %v601 = vpop.trf.xlu0
        %602 = vxpose.xlu0.b32.start [1/16] %v553, 128
        %603 = vxpose.xlu0.b32.cont [2/16] %v556, 128
        %604 = vxpose.xlu0.b32.cont [3/16] 0.0, 128
        %605 = vxpose.xlu0.b32.cont [4/16] 0.0, 128
        %606 = vxpose.xlu0.b32.cont [5/16] 0.0, 128
        %607 = vxpose.xlu0.b32.cont [6/16] 0.0, 128
        %608 = vxpose.xlu0.b32.cont [7/16] 0.0, 128
        %609 = vxpose.xlu0.b32.cont [8/16] 0.0, 128
        %610 = vxpose.xlu0.b32.cont [9/16] 0.0, 128
        %611 = vxpose.xlu0.b32.cont [10/16] 0.0, 128
        %612 = vxpose.xlu0.b32.cont [11/16] 0.0, 128
        %613 = vxpose.xlu0.b32.cont [12/16] 0.0, 128
        %614 = vxpose.xlu0.b32.cont [13/16] 0.0, 128
        %615 = vxpose.xlu0.b32.cont [14/16] 0.0, 128
        %616 = vxpose.xlu0.b32.cont [15/16] 0.0, 128
        %617 = vxpose.xlu0.b32.end [16/16] 0.0, 128
        %v618 = vpop.trf.xlu0
        %v619 = vpop.trf.xlu0
        %v620 = vpop.trf.xlu0
        %v621 = vpop.trf.xlu0
        %v622 = vpop.trf.xlu0
        %v623 = vpop.trf.xlu0
        %v624 = vpop.trf.xlu0
        %v625 = vpop.trf.xlu0
        %v626 = vpop.trf.xlu0
        %v627 = vpop.trf.xlu0
        %v628 = vpop.trf.xlu0
        %v629 = vpop.trf.xlu0
        %v630 = vpop.trf.xlu0
        %v631 = vpop.trf.xlu0
        %v632 = vpop.trf.xlu0
        %v633 = vpop.trf.xlu0
        %634 = vxpose.xlu0.b32.start [1/16] %v559, 128
        %635 = vxpose.xlu0.b32.cont [2/16] %v562, 128
        %636 = vxpose.xlu0.b32.cont [3/16] 0.0, 128
        %637 = vxpose.xlu0.b32.cont [4/16] 0.0, 128
        %638 = vxpose.xlu0.b32.cont [5/16] 0.0, 128
        %639 = vxpose.xlu0.b32.cont [6/16] 0.0, 128
        %640 = vxpose.xlu0.b32.cont [7/16] 0.0, 128
        %641 = vxpose.xlu0.b32.cont [8/16] 0.0, 128
        %642 = vxpose.xlu0.b32.cont [9/16] 0.0, 128
        %643 = vxpose.xlu0.b32.cont [10/16] 0.0, 128
        %644 = vxpose.xlu0.b32.cont [11/16] 0.0, 128
        %645 = vxpose.xlu0.b32.cont [12/16] 0.0, 128
        %646 = vxpose.xlu0.b32.cont [13/16] 0.0, 128
        %647 = vxpose.xlu0.b32.cont [14/16] 0.0, 128
        %648 = vxpose.xlu0.b32.cont [15/16] 0.0, 128
        %649 = vxpose.xlu0.b32.end [16/16] 0.0, 128
        %v650 = vpop.trf.xlu0
        %v651 = vpop.trf.xlu0
        %v652 = vpop.trf.xlu0
        %v653 = vpop.trf.xlu0
        %v654 = vpop.trf.xlu0
        %v655 = vpop.trf.xlu0
        %v656 = vpop.trf.xlu0
        %v657 = vpop.trf.xlu0
        %v658 = vpop.trf.xlu0
        %v659 = vpop.trf.xlu0
        %v660 = vpop.trf.xlu0
        %v661 = vpop.trf.xlu0
        %v662 = vpop.trf.xlu0
        %v663 = vpop.trf.xlu0
        %v664 = vpop.trf.xlu0
        %v665 = vpop.trf.xlu0
        %666 = vxpose.xlu0.b32.start [1/16] %v565, 128
        %667 = vxpose.xlu0.b32.cont [2/16] %v568, 128
        %668 = vxpose.xlu0.b32.cont [3/16] 0.0, 128
        %669 = vxpose.xlu0.b32.cont [4/16] 0.0, 128
        %670 = vxpose.xlu0.b32.cont [5/16] 0.0, 128
        %671 = vxpose.xlu0.b32.cont [6/16] 0.0, 128
        %672 = vxpose.xlu0.b32.cont [7/16] 0.0, 128
        %673 = vxpose.xlu0.b32.cont [8/16] 0.0, 128
        %674 = vxpose.xlu0.b32.cont [9/16] 0.0, 128
        %675 = vxpose.xlu0.b32.cont [10/16] 0.0, 128
        %676 = vxpose.xlu0.b32.cont [11/16] 0.0, 128
        %677 = vxpose.xlu0.b32.cont [12/16] 0.0, 128
        %678 = vxpose.xlu0.b32.cont [13/16] 0.0, 128
        %679 = vxpose.xlu0.b32.cont [14/16] 0.0, 128
        %680 = vxpose.xlu0.b32.cont [15/16] 0.0, 128
        %681 = vxpose.xlu0.b32.end [16/16] 0.0, 128
        %v682 = vpop.trf.xlu0
        %v683 = vpop.trf.xlu0
        %v684 = vpop.trf.xlu0
        %v685 = vpop.trf.xlu0
        %v686 = vpop.trf.xlu0
        %v687 = vpop.trf.xlu0
        %v688 = vpop.trf.xlu0
        %v689 = vpop.trf.xlu0
        %v690 = vpop.trf.xlu0
        %v691 = vpop.trf.xlu0
        %v692 = vpop.trf.xlu0
        %v693 = vpop.trf.xlu0
        %v694 = vpop.trf.xlu0
        %v695 = vpop.trf.xlu0
        %v696 = vpop.trf.xlu0
        %v697 = vpop.trf.xlu0
        %s698 = smul.u32 %s307, 16
        %s699 = scalar_lea.vmem %s304, %s698 [#allocation10]
        %vm700 = vcmask 130048
        %701 = vst.msk [vmem:[%s699] sm:$0xff] %vm700, %v586
        %702 = vst.msk [vmem:[%s699 + $0x8] sm:$0xff] %vm700, %v587
        %703 = vst.msk [vmem:[%s699 + $0x10] sm:$0xff] %vm700, %v618
        %704 = vst.msk [vmem:[%s699 + $0x18] sm:$0xff] %vm700, %v619
        %705 = vst.msk [vmem:[%s699 + $0x20] sm:$0xff] %vm700, %v650
        %706 = vst.msk [vmem:[%s699 + $0x28] sm:$0xff] %vm700, %v651
        %707 = vst.msk [vmem:[%s699 + $0x30] sm:$0xff] %vm700, %v682
        %708 = vst.msk [vmem:[%s699 + $0x38] sm:$0xff] %vm700, %v683
        %s709 = sand.u32 %s141, 1
        %s710 = scalar_lea.sflag [#allocation4], %s709
        %s711 = sand.u32 %s141, 1
        %s712 = smul.addr %s711, 128
        %s713 = scalar_lea.vmem [#allocation10], %s712
        // Predicated region
        $region57: #{tpu_custom_call.1} parent=35 // pred_check
          %p714 = pneg %p151
        $region58: #{tpu_custom_call.1} parent=35 // pred_check_branch
          %716 = sbr.rel (%p714) target = $region60
        $region59: #{tpu_custom_call.1} parent=35 // pred_region
          %718 = vsyncadd %s710, 0
          %s719 = smul.addr %s29, 16
          %s720 = smul.addr %s719, 8
          %s721 = scalar_lea.hbm %s4, %s720
          %s722 = sshll.u32 %s713, 4
          %s723 = int_to_ptr.vmem [resolvable:$true] %s722
          %s724 = sshll.u32 %s721, 4
          %s725 = int_to_ptr.hbm [resolvable:$true] %s724
          %730 = dma.vmem_to_hbm [thread:$0]  %s723, 2048, %s725, %s710, 128, 128, 8
        $region60: #{tpu_custom_call.1} parent=35 // pred_fallthru
          _
      $region36: #{tpu_custom_call.1} parent=5 // pred_fallthru
        _
      %p731 = scmp.le.s32.totalorder 2, %s20
      // Predicated region
      $region61: #{tpu_custom_call.1} parent=5 // pred_check
        %p732 = pneg %p731
      $region62: #{tpu_custom_call.1} parent=5 // pred_check_branch
        %734 = sbr.rel (%p732) target = $region64
      $region63: #{tpu_custom_call.1} parent=5 // pred_region
        %s735 = ssub.s32 %s20, 2
        // Predicated region
        $region65: #{tpu_custom_call.1} parent=63 // pred_check
          %p736 = pneg %p157
        $region66: #{tpu_custom_call.1} parent=63 // pred_check_branch
          %738 = sbr.rel (%p736) target = $region68
        $region67: #{tpu_custom_call.1} parent=63 // pred_region
          %s739 = sand.u32 %s142, 1
          %s740 = scalar_lea.sflag [#allocation4], %s739
          %s741 = sand.u32 %s142, 1
          %s742 = smul.addr %s741, 128
          %s743 = scalar_lea.vmem [#allocation10], %s742
          %745 = dma.done %s740, 2048
        $region68: #{tpu_custom_call.1} parent=63 // pred_fallthru
          _
      $region64: #{tpu_custom_call.1} parent=5 // pred_fallthru
        _
    $region6: #{tpu_custom_call.1} parent=1 // loop_footer
      %s24 = sadd.s32 1, %s20
    $region7: #{tpu_custom_call.1} parent=1 // loop_footer_branch
      %19 = sbr.rel target = $region3
    $region8: #{tpu_custom_call.1} parent=1 // loop_exit
      _
    %746 = vsyncpa [#allocation3], 1
    %s747 = scalar_lea.sflag [#allocation3], 1
    %748 = vsyncpa %s747, 1
    %749 = vsyncpa [#allocation6], 1
    %s750 = scalar_lea.sflag [#allocation6], 1
    %751 = vsyncpa %s750, 1
    %752 = vsyncpa [#allocation9], 1
    %753 = vsyncpa [#allocation4], 1
    %s754 = scalar_lea.sflag [#allocation4], 1
    %755 = vsyncpa %s754, 1

</llo_original>
